<compile_context>
chip_gen: v7x
topology: tpu7x:2x2x1
jax: 0.10.0
libtpu: 0.0.40
codegen_flags: <defaults>
</compile_context>

<pallas_src>
import functools

import jax
import jax.numpy as jnp
from jax.experimental import pallas as pl
from jax.experimental.pallas import tpu as pltpu


def _rmsnorm_kernel(x_ref, w_ref, o_ref, *, eps: float, inv_d: float):
    x = x_ref[...]
    if x.dtype != jnp.float32:
        x = x.astype(jnp.float32)          # f32 accumulation (needed for bf16 inputs)
    # mean(x^2) as sum * (1/D): the 1/D multiply folds into one VPU mul.
    ms = jnp.sum(x * x, axis=-1, keepdims=True) * inv_d    # [tm, 1]
    inv = jax.lax.rsqrt(ms + eps)                           # EUP slot (cheap)
    o_ref[...] = (x * inv * w_ref[...]).astype(o_ref.dtype)


def _vmem_capacity_bytes() -> int:
    """Physical VMEM per TensorCore; conservative fallback if the query fails."""
    try:
        return int(pltpu.get_tpu_info().vmem_capacity_bytes)
    except Exception:
        return 64 << 20  # v7x per-TC size: safe lower bound across generations


def _round_up(a: int, b: int) -> int:
    return ((a + b - 1) // b) * b


def _pick_row_block(n_rows: int, d: int, itemsize: int,
                    tile_budget_bytes: int, pack: int) -> int:
    """Largest row tile whose double-buffered in+out traffic fits the budget."""
    per_row = 2 * 2 * d * itemsize          # 2 bufs x (input + output)
    s_pad = _round_up(max(n_rows, 1), pack)
    for cand in (1024, 512, 256, 128, 64, 32, 16, 8):
        if cand % pack:
            continue
        if cand > s_pad:
            continue
        if cand * per_row <= tile_budget_bytes:
            return cand
    return pack


def rms_norm(x: jax.Array, weight: jax.Array, *, eps: float = 1e-5,
             row_block: int | None = None) -> jax.Array:
    """RMSNorm over the last axis of x with a per-feature gain.

    `weight` may be a [D] vector or the TT-style (R, D) tile-expanded weight
    (all rows identical); only the per-feature gain is used either way.
    """
    orig_shape = x.shape
    D = orig_shape[-1]
    if weight.ndim == 2:
        assert weight.shape[-1] == D
        weight_row = weight[0]              # TT expands [D] -> (32, D); rows identical
    else:
        assert weight.shape == (D,)
        weight_row = weight

    x2d = x.reshape(-1, D)
    S = x2d.shape[0]

    itemsize = jnp.dtype(x.dtype).itemsize
    # sublane packing: f32 -> 8, bf16 -> 16, int8/fp8 -> 32
    pack = 8 if itemsize >= 4 else (16 if itemsize == 2 else 32)

    cap = _vmem_capacity_bytes()
    # Budget roughly half of VMEM (minus headroom) for the pipelined tiles:
    # ~24 MiB on v7x (64 MiB VMEM), ~56 MiB on v5e/v6e (128 MiB VMEM).
    tile_budget = max(4 << 20, cap // 2 - (8 << 20))
    if row_block is None:
        row_block = _pick_row_block(S, D, itemsize, tile_budget, pack)

    s_pad = _round_up(S, row_block)
    x_in = x2d if s_pad == S else jnp.pad(x2d, ((0, s_pad - S), (0, 0)))

    # Lane-dense, resident, f32 weight row (cast hoisted out of the kernel).
    w2d = weight_row.astype(jnp.float32).reshape(1, D)

    kernel = functools.partial(_rmsnorm_kernel, eps=float(eps), inv_d=1.0 / D)

    # Scoped VMEM: double-buffered tiles + weight + slack, but never past the
    # physical capacity (minus headroom).
    tiles_bytes = 2 * 2 * row_block * D * itemsize
    vmem_limit = max(16 << 20, min(cap - (8 << 20), tiles_bytes + (16 << 20)))

    out = pl.pallas_call(
        kernel,
        out_shape=jax.ShapeDtypeStruct((s_pad, D), x.dtype),
        grid_spec=pltpu.PrefetchScalarGridSpec(
            num_scalar_prefetch=0,
            grid=(s_pad // row_block,),
            in_specs=[
                pl.BlockSpec((row_block, D), lambda i: (i, 0)),  # x tile
                pl.BlockSpec((1, D), lambda i: (0, 0)),          # weight (resident)
            ],
            out_specs=pl.BlockSpec((row_block, D), lambda i: (i, 0)),
        ),
        compiler_params=pltpu.CompilerParams(
            dimension_semantics=("parallel",),   # shards rows across TCs on v7x
            vmem_limit_bytes=int(vmem_limit),
        ),
    )(x_in, w2d)

    out = out if s_pad == S else out[:S]
    return out.reshape(orig_shape)


def rms_norm_ref(x, weight, eps=1e-5):
    w = weight[0] if weight.ndim == 2 else weight
    xf = x.astype(jnp.float32)
    ms = jnp.mean(xf * xf, axis=-1, keepdims=True)
    return (xf * jax.lax.rsqrt(ms + eps) * w.astype(jnp.float32)).astype(x.dtype)


if __name__ == "__main__":
    key = jax.random.PRNGKey(0)
    kx, kw, kx2, kw2, kx3, kw3 = jax.random.split(key, 6)
    eps = 1e-5

    # Case 1: small tile-aligned input; weight expanded to (32, D) like the TT module.
    S, D = 8, 128
    x = jax.random.normal(kx, (S, D), dtype=jnp.float32)
    w_row = 1.0 + 0.01 * jax.random.normal(kw, (D,), dtype=jnp.float32)
    weight_tt = jnp.broadcast_to(w_row[None, :], (32, D))
    out = rms_norm(x, weight_tt, eps=eps)
    jax.block_until_ready(out)
    ref = rms_norm_ref(x, weight_tt, eps=eps)
    assert jnp.allclose(out, ref, atol=1e-5, rtol=1e-5), "mismatch vs reference (case 1)"

    # Case 2: row count not divisible by the tile (exercises the padded tail).
    S2, D2 = 200, 256
    x2 = jax.random.normal(kx2, (S2, D2), dtype=jnp.float32)
    w2 = 1.0 + 0.01 * jax.random.normal(kw2, (D2,), dtype=jnp.float32)
    out2 = rms_norm(x2, w2, eps=eps)
    jax.block_until_ready(out2)
    ref2 = rms_norm_ref(x2, w2, eps=eps)
    assert jnp.allclose(out2, ref2, atol=1e-5, rtol=1e-5), "mismatch vs reference (case 2)"

    # Case 3: bf16 activations (f32 accumulation inside the kernel), ragged rows.
    S3, D3 = 24, 128
    x3 = jax.random.normal(kx3, (S3, D3), dtype=jnp.float32).astype(jnp.bfloat16)
    w3 = (1.0 + 0.01 * jax.random.normal(kw3, (D3,), dtype=jnp.float32)).astype(jnp.bfloat16)
    out3 = rms_norm(x3, w3, eps=eps)
    jax.block_until_ready(out3)
    ref3 = rms_norm_ref(x3, w3, eps=eps)
    assert jnp.allclose(out3.astype(jnp.float32), ref3.astype(jnp.float32),
                        atol=5e-2, rtol=5e-2), "mismatch vs reference (case 3)"

    print("KERNEL_OK")
</pallas_src>

<mosaic_0001>
module attributes {stable_mosaic.version = 11 : i64} {
  func.func @_rmsnorm_kernel(%arg0: i32, %arg1: memref<8x128xf32, #tpu.memory_space<vmem>>, %arg2: memref<1x128xf32, #tpu.memory_space<vmem>>, %arg3: memref<8x128xf32, #tpu.memory_space<vmem>>) attributes {dimension_semantics = [#tpu.dimension_semantics<parallel>], iteration_bounds = array<i64: 1>, scalar_prefetch = 0 : i64, scratch_operands = 0 : i64, tpu.core_type = #tpu.core_type<tc>, window_params = [{transform_indices = @transform_0, window_bounds = array<i64: 8, 128>}, {pipeline_mode = #tpu.pipeline_mode<synchronous>, transform_indices = @transform_1, window_bounds = array<i64: 1, 128>}, {transform_indices = @transform_2, window_bounds = array<i64: 8, 128>}]} {
    %c0 = arith.constant 0 : index
    %c0_0 = arith.constant 0 : index
    %0 = vector.load %arg1[%c0, %c0_0] : memref<8x128xf32, #tpu.memory_space<vmem>>, vector<8x128xf32>
    %1 = arith.mulf %0, %0 : vector<8x128xf32>
    %cst = arith.constant dense<0.000000e+00> : vector<8xf32>
    %2 = vector.multi_reduction <add>, %1, %cst [1] : vector<8x128xf32> to vector<8xf32>
    %3 = vector.shape_cast %2 : vector<8xf32> to vector<8x1xf32>
    %cst_1 = arith.constant 7.812500e-03 : f32
    %4 = vector.broadcast %cst_1 : f32 to vector<8x1xf32>
    %5 = arith.mulf %3, %4 : vector<8x1xf32>
    %cst_2 = arith.constant 9.99999974E-6 : f32
    %6 = vector.broadcast %cst_2 : f32 to vector<8x1xf32>
    %7 = arith.addf %5, %6 : vector<8x1xf32>
    %8 = math.rsqrt %7 : vector<8x1xf32>
    %9 = vector.broadcast %8 : vector<8x1xf32> to vector<8x128xf32>
    %10 = arith.mulf %0, %9 : vector<8x128xf32>
    %c0_3 = arith.constant 0 : index
    %c0_4 = arith.constant 0 : index
    %11 = vector.load %arg2[%c0_3, %c0_4] : memref<1x128xf32, #tpu.memory_space<vmem>>, vector<1x128xf32>
    %12 = vector.broadcast %11 : vector<1x128xf32> to vector<8x128xf32>
    %13 = arith.mulf %10, %12 : vector<8x128xf32>
    %c0_5 = arith.constant 0 : index
    %c0_6 = arith.constant 0 : index
    %14 = vector.load %arg3[%c0_5, %c0_6] : memref<8x128xf32, #tpu.memory_space<vmem>>, vector<8x128xf32>
    tpu.vector_store %arg3[%c0_5, %c0_6], %13 {strides = array<i32>} : memref<8x128xf32, #tpu.memory_space<vmem>>, vector<8x128xf32>,
    return
  }
  func.func @transform_0(%arg0: i32) -> (i32, i32) {
    %c0_i32 = arith.constant 0 : i32
    %c0_i32_0 = arith.constant 0 : i32
    return %arg0, %c0_i32 : i32, i32
  }
  func.func @transform_1(%arg0: i32) -> (i32, i32) {
    %c0_i32 = arith.constant 0 : i32
    %c0_i32_0 = arith.constant 0 : i32
    %c0_i32_1 = arith.constant 0 : i32
    return %c0_i32, %c0_i32_0 : i32, i32
  }
  func.func @transform_2(%arg0: i32) -> (i32, i32) {
    %c0_i32 = arith.constant 0 : i32
    %c0_i32_0 = arith.constant 0 : i32
    return %arg0, %c0_i32 : i32, i32
  }
}

</mosaic_0001>

<llo_original>
// kernel: tpu_custom_call.1
$region0: #{tpu_custom_call.1}
  #allocation0 [shape = 'u32[]', space=smem, size = 0x4, offset = 0x4, fixed_abs, tag = 'smem constant byte address 0x4 - core index']
  #allocation1 [shape = 'u32[144,128]{1,0:T(1,128)}', space=vmem, size = 0x12000, scoped, tag = 'internal scratch']
  %s0 = inlined_call_operand.hbm [shape: f32[8,128], index: 0, kind: input, shape index: {}]
  %s1 = inlined_call_operand.vmem [shape: f32[1,128], index: 1, kind: input, shape index: {}]
  %s2 = inlined_call_operand.hbm [shape: f32[8,128], index: 2, kind: output, shape index: {}]
  %s3 = sld [smem:[#allocation0]]
  $region22: #{tpu_custom_call.1} parent=0
    _
  %s5 = ssub.s32 1, %s3
  %s6 = scalar_select 0, %s5, %s3
  $region1: #{tpu_custom_call.1} parent=0
    #allocation2 [shape = 'u8[4096]{0}', space=vmem, size = 0x1000, scoped, tag = 'input window, operand 0, single buffered']
    #allocation3 [shape = 's32[1]{0}', space=sflag, size = 0x4, scoped, tag = 'scoped memory for tpu_custom_call.1']
    #allocation4 [shape = 's32[1]{0}', space=sflag, size = 0x4, scoped, tag = 'scoped memory for tpu_custom_call.1']
    #allocation5 [shape = 'u8[4096]{0}', space=vmem, size = 0x1000, scoped, tag = 'output window, operand 0, single buffered']
    %7 = vsyncpa [#allocation3], 0
    %8 = vsyncpa [#allocation4], 0
    // Predicated region
    $region2: #{tpu_custom_call.1} parent=1 // pred_check
      _
    $region3: #{tpu_custom_call.1} parent=1 // pred_check_branch
      %10 = sbr.rel (0) target = $region5
    $region4: #{tpu_custom_call.1} parent=1 // pred_region
      %s12 = ssub.s32 128, 128
      %13 = vsyncadd [#allocation3], %s12
      %s15 = sshll.u32 [#allocation2], 4
      %s16 = int_to_ptr.vmem [resolvable:$true] %s15
      %18 = dma.hbm_to_vmem [thread:$0]  %s0, 128, %s16, [#allocation3]
    $region5: #{tpu_custom_call.1} parent=1 // pred_fallthru
      _
    // Predicated region
    $region6: #{tpu_custom_call.1} parent=1 // pred_check
      _
    $region7: #{tpu_custom_call.1} parent=1 // pred_check_branch
      %20 = sbr.rel (0) target = $region9
    $region8: #{tpu_custom_call.1} parent=1 // pred_region
      _
    $region9: #{tpu_custom_call.1} parent=1 // pred_fallthru
      _
    // Predicated region
    $region10: #{tpu_custom_call.1} parent=1 // pred_check
      _
    $region11: #{tpu_custom_call.1} parent=1 // pred_check_branch
      %22 = sbr.rel (0) target = $region13
    $region12: #{tpu_custom_call.1} parent=1 // pred_region
      %23 = dma.done [#allocation3], 128
    $region13: #{tpu_custom_call.1} parent=1 // pred_fallthru
      _
    %v24 = vld [vmem:[#allocation2] sm:$0xff]
    %v25 = vmul.f32 %v24, %v24
    %26 = vadd.xlane.f32.xlu0 %v25
    %v27 = vpop.xlane.xlu0 %26
    %v28 = vmul.f32 %v27, 0.0078125
    %v29 = vadd.f32 %v28, 1e-05
    %v30 = vrsqrt.pop %v29
    %v31 = vmul.f32 %v24, %v30
    %v32 = vld [vmem:[%s1] sm:$0x1]
    %v34 = vlaneseq
    %v35 = vshrl.u32 %v34, 7
    %v36 = vsub.s32 0, %v35
    %v37 = vrot.slane %v32, %v36
    %v39 = vmul.f32 %v31, %v37
    %40 = vst [vmem:[#allocation5] sm:$0xff] %v39
    // Predicated region
    $region14: #{tpu_custom_call.1} parent=1 // pred_check
      _
    $region15: #{tpu_custom_call.1} parent=1 // pred_check_branch
      %42 = sbr.rel (0) target = $region17
    $region16: #{tpu_custom_call.1} parent=1 // pred_region
      %s44 = ssub.s32 128, 128
      %45 = vsyncadd [#allocation4], %s44
      %s47 = sshll.u32 [#allocation5], 4
      %s48 = int_to_ptr.vmem [resolvable:$true] %s47
      %50 = dma.vmem_to_hbm [thread:$0]  %s48, 128, %s2, [#allocation4]
    $region17: #{tpu_custom_call.1} parent=1 // pred_fallthru
      _
    // Predicated region
    $region18: #{tpu_custom_call.1} parent=1 // pred_check
      _
    $region19: #{tpu_custom_call.1} parent=1 // pred_check_branch
      %52 = sbr.rel (0) target = $region21
    $region20: #{tpu_custom_call.1} parent=1 // pred_region
      %53 = dma.done [#allocation4], 128
    $region21: #{tpu_custom_call.1} parent=1 // pred_fallthru
      _
    %54 = vsyncpa [#allocation3], 1
    %55 = vsyncpa [#allocation4], 1

</llo_original>
